<compile_context>
chip_gen: v7x
topology: tpu7x:2x2x1
jax: 0.10.0
libtpu: 0.0.40
codegen_flags: <defaults>
</compile_context>

<pallas_src>
import jax
import jax.numpy as jnp
import numpy as np
from jax.experimental import pallas as pl
from jax.experimental.pallas import tpu as pltpu


# Set True on v7x with bf16 HBM I/O: moves the a_id sigmoid's divide onto the
# hardware approx-reciprocal.  Kept exact here so the demo matches the reference.
_APPROX_GATE_RECIP = False


# ----------------------------- Pallas kernel --------------------------------
def lgcm_kernel(x_ref,                    # (bn, C, HWp)  channel-major pixels
                wg1_ref, bg1_ref,         # gap branch:  (mip, C), (mip, 1)   [BN + 1/HW folded]
                wg2_ref, bg2_ref,         # gap branch:  (C, mip), (C, 1)
                w1_ref, b1_ref,           # main branch: (mip, C), (mip, 1)   [BN folded]
                w2_ref, b2_ref,           # main branch: (C, mip), (C, 1)
                out_ref):                 # (bn, C, HWp)
    bn, C, HWp = x_ref.shape
    mip = w1_ref.shape[0]

    # Hoist weight reads and bias broadcasts out of the per-item loop
    # (JAX does not CSE broadcast_in_dim, so in-loop they re-materialize).
    w1, w2 = w1_ref[...], w2_ref[...]
    wg1, wg2 = wg1_ref[...], wg2_ref[...]
    bg1, bg2 = bg1_ref[...], bg2_ref[...]
    b1 = jnp.broadcast_to(b1_ref[...], (mip, HWp))
    b2 = jnp.broadcast_to(b2_ref[...], (C, HWp))

    # lax-level loop (not a static Python unroll) bounds live ranges per item.
    @pl.loop(0, bn)
    def _(b):
        x = x_ref[b].astype(jnp.float32)                                  # (C, HWp)

        # --- main branch: conv1(+bn2) + relu, conv2 + sigmoid (lane-dense matmuls) ---
        h = jnp.maximum(jnp.dot(w1, x, preferred_element_type=jnp.float32) + b1, 0.0)
        z = jnp.dot(w2, h, preferred_element_type=jnp.float32) + b2       # (C, HWp)
        a_id = pl.reciprocal(1.0 + jnp.exp(-z), approx=_APPROX_GATE_RECIP)

        # --- gap branch: GAP (lane reduce; 1/HW folded into wg1) then tiny matmuls ---
        # (padded lanes are zero, so the sum equals the sum over the true HW)
        gap = jnp.sum(x, axis=-1, keepdims=True)                          # (C, 1)
        hg = jnp.maximum(
            jnp.dot(wg1, gap, preferred_element_type=jnp.float32) + bg1, 0.0)
        a_gap = jax.nn.sigmoid(
            jnp.dot(wg2, hg, preferred_element_type=jnp.float32) + bg2)   # (C, 1)

        # --- gating: identity * a_gap * a_identity (padded lanes stay zero) ---
        out_ref[b] = (x * a_gap * a_id).astype(out_ref.dtype)


# ------------------------------ wrapper --------------------------------------
def _pick_batch_block(n, per_item_bytes, target_bytes, min_split_bytes):
    """Batch items per grid step for a mem-bound kernel: the largest divisor of n
    whose block fits the per-step target (bigger blocks => closer to HBM roofline).
    The block is only split into >= 2 grid steps (feeds v7x's two TensorCores)
    when each piece stays above `min_split_bytes`; on single-TC chips smaller
    blocks are pure loss.  NOTE: prime / tiny n degrades to bn=1 (correct, but a
    performance cliff for callers)."""
    divisors = [d for d in range(1, n + 1) if n % d == 0]
    fitting = [d for d in divisors if d * per_item_bytes <= target_bytes] or [1]
    bn = max(fitting)
    if bn == n and n > 1:
        largest_split = max(d for d in divisors if d < n)
        if largest_split * per_item_bytes >= min_split_bytes:
            bn = largest_split
    return bn


def lgcm_forward(x_nchw, kparams, *,
                 target_block_bytes=6 << 20,   # ~6 MiB/step: past the HBM-roofline knee
                 min_split_bytes=2 << 20):
    N, C, H, W = x_nchw.shape
    mip = kparams["w1t"].shape[0]
    assert kparams["w1t"].shape[1] == C and kparams["w2t"].shape[0] == C, (
        "LGCM gating (x * a_gap * a_id) requires inp == oup == C")
    HW = H * W

    # Channel-major layout; pure reshape (no HBM transpose).  Pad HW up to a
    # multiple of 128 so output stores are unmasked (lane-dense).
    HWp = ((HW + 127) // 128) * 128
    x = x_nchw.reshape(N, C, HW)
    if HWp != HW:
        x = jnp.pad(x, ((0, 0), (0, 0), (0, HWp - HW)))

    item_bytes = C * HWp * x.dtype.itemsize
    bn = _pick_batch_block(N, item_bytes, target_block_bytes, min_split_bytes)
    grid = (N // bn,)
    block_bytes = bn * item_bytes

    # Explicit VMEM budget: double-buffered in + out blocks, weights, in-loop temps.
    # v5e's scoped default is only 16 MiB; v7x physical VMEM is 64 MiB => cap at 56.
    weight_keys = ("wg1t", "bg1", "wg2t", "bg2", "w1t", "b1", "w2t", "b2")
    weight_bytes = sum(int(kparams[k].size) * 4 for k in weight_keys)
    temp_bytes = (5 * C + 3 * mip) * HWp * 4
    vmem_limit = int(np.clip(4 * block_bytes + 2 * weight_bytes + temp_bytes + (2 << 20),
                             32 << 20, 56 << 20))

    # Advisory cost hint for XLA's scheduler around this mem-bound custom call.
    cost = pl.CostEstimate(
        flops=4 * N * C * mip * HW + 3 * N * C * HW,
        transcendentals=2 * N * C * HW,
        bytes_accessed=2 * N * C * HW * x.dtype.itemsize)

    full = lambda a: pl.BlockSpec(a.shape, lambda n: (0,) * a.ndim)

    out = pl.pallas_call(
        lgcm_kernel,
        out_shape=jax.ShapeDtypeStruct((N, C, HWp), x.dtype),
        grid_spec=pltpu.PrefetchScalarGridSpec(
            num_scalar_prefetch=0,
            grid=grid,
            in_specs=[pl.BlockSpec((bn, C, HWp), lambda n: (n, 0, 0))]
                     + [full(kparams[k]) for k in weight_keys],
            out_specs=pl.BlockSpec((bn, C, HWp), lambda n: (n, 0, 0)),
        ),
        compiler_params=pltpu.CompilerParams(
            dimension_semantics=("parallel",),
            vmem_limit_bytes=vmem_limit),
        cost_estimate=cost,
    )(x, *[kparams[k] for k in weight_keys])

    if HWp != HW:
        out = out[..., :HW]
    return out.reshape(N, C, H, W)


# ------------------------ parameter construction -----------------------------
def make_module_params(key, inp, oup, reduction=32):
    """Synthetic PyTorch-style parameters: 1x1 conv weights (C_out, C_in), biases,
    BatchNorm running stats / affine params (eval mode)."""
    mip = max(8, inp // reduction)
    ks = jax.random.split(key, 16)
    u = lambda k, shape, s=0.1: jax.random.uniform(k, shape, jnp.float32, -s, s)
    return dict(
        mip=mip,
        conv_gap1_w=u(ks[0], (mip, inp)), conv_gap1_b=u(ks[1], (mip,)),
        conv1_w=u(ks[2], (mip, inp)),     conv1_b=u(ks[3], (mip,)),
        conv_gap2_w=u(ks[4], (oup, mip)), conv_gap2_b=u(ks[5], (oup,)),
        conv2_w=u(ks[6], (oup, mip)),     conv2_b=u(ks[7], (oup,)),
        bn1_gamma=1.0 + u(ks[8], (mip,)), bn1_beta=u(ks[9], (mip,)),
        bn1_mean=u(ks[10], (mip,)),       bn1_var=1.0 + jnp.abs(u(ks[11], (mip,))),
        bn2_gamma=1.0 + u(ks[12], (mip,)), bn2_beta=u(ks[13], (mip,)),
        bn2_mean=u(ks[14], (mip,)),        bn2_var=1.0 + jnp.abs(u(ks[15], (mip,))),
    )


def fold_params_for_kernel(p, hw, eps=1e-5):
    """Fold inference-mode BN into the preceding conv, fold 1/HW of GAP into the
    gap-branch first conv, keep (C_out, C_in) weights for the channel-major kernel.
    bn(conv(x)) = x @ (W*s) + (b*s + t)."""
    assert p["conv_gap1_w"].shape[1] == p["conv_gap2_w"].shape[0], (
        "LGCM requires inp == oup for the final gating multiply")
    s1 = p["bn1_gamma"] / jnp.sqrt(p["bn1_var"] + eps)
    t1 = p["bn1_beta"] - p["bn1_mean"] * s1
    s2 = p["bn2_gamma"] / jnp.sqrt(p["bn2_var"] + eps)
    t2 = p["bn2_beta"] - p["bn2_mean"] * s2
    return dict(
        # gap branch (1/HW of the mean folded into wg1)
        wg1t=(p["conv_gap1_w"] * s1[:, None]) * (1.0 / hw),      # (mip, C)
        bg1=(p["conv_gap1_b"] * s1 + t1)[:, None],               # (mip, 1)
        wg2t=p["conv_gap2_w"],                                   # (C, mip)
        bg2=p["conv_gap2_b"][:, None],                           # (C, 1)
        # main branch
        w1t=p["conv1_w"] * s2[:, None],                          # (mip, C)
        b1=(p["conv1_b"] * s2 + t2)[:, None],                    # (mip, 1)
        w2t=p["conv2_w"],                                        # (C, mip)
        b2=p["conv2_b"][:, None],                                # (C, 1)
    )


# ------------------------------ reference ------------------------------------
def lgcm_reference(x, p, eps=1e-5):
    """Pure-JAX NCHW reference mirroring the PyTorch module (eval-mode BN)."""
    def conv1x1(t, w, b):                     # t: (N, Cin, H, W), w: (Cout, Cin)
        return jnp.einsum("oc,nchw->nohw", w, t) + b[None, :, None, None]

    def bn(t, g, be, m, v):
        c = lambda a: a[None, :, None, None]
        return (t - c(m)) / jnp.sqrt(c(v) + eps) * c(g) + c(be)

    x_gap = jnp.mean(x, axis=(2, 3), keepdims=True)
    x_gap = conv1x1(x_gap, p["conv_gap1_w"], p["conv_gap1_b"])
    x_gap = jnp.maximum(bn(x_gap, p["bn1_gamma"], p["bn1_beta"],
                           p["bn1_mean"], p["bn1_var"]), 0.0)
    a_gap = jax.nn.sigmoid(conv1x1(x_gap, p["conv_gap2_w"], p["conv_gap2_b"]))

    h = conv1x1(x, p["conv1_w"], p["conv1_b"])
    h = jnp.maximum(bn(h, p["bn2_gamma"], p["bn2_beta"],
                       p["bn2_mean"], p["bn2_var"]), 0.0)
    a_id = jax.nn.sigmoid(conv1x1(h, p["conv2_w"], p["conv2_b"]))
    return x * a_gap * a_id


if __name__ == "__main__":
    key = jax.random.PRNGKey(0)
    kx, kp = jax.random.split(key)

    N, C, H, W = 2, 32, 16, 16          # inp == oup == 32, mip = max(8, 32//32) = 8
    x = jax.random.normal(kx, (N, C, H, W), jnp.float32)

    module_params = make_module_params(kp, inp=C, oup=C, reduction=32)
    kernel_params = fold_params_for_kernel(module_params, hw=H * W)

    out = jax.block_until_ready(lgcm_forward(x, kernel_params))
    ref = jax.block_until_ready(lgcm_reference(x, module_params))

    assert out.shape == (N, C, H, W)
    np.testing.assert_allclose(np.asarray(out), np.asarray(ref), rtol=1e-5, atol=3e-5)
    print("KERNEL_OK")
</pallas_src>

<mosaic_0001>
module attributes {stable_mosaic.version = 11 : i64} {
  func.func @lgcm_kernel(%arg0: i32, %arg1: memref<2x32x256xf32, #tpu.memory_space<vmem>>, %arg2: memref<8x32xf32, #tpu.memory_space<vmem>>, %arg3: memref<8x1xf32, #tpu.memory_space<vmem>>, %arg4: memref<32x8xf32, #tpu.memory_space<vmem>>, %arg5: memref<32x1xf32, #tpu.memory_space<vmem>>, %arg6: memref<8x32xf32, #tpu.memory_space<vmem>>, %arg7: memref<8x1xf32, #tpu.memory_space<vmem>>, %arg8: memref<32x8xf32, #tpu.memory_space<vmem>>, %arg9: memref<32x1xf32, #tpu.memory_space<vmem>>, %arg10: memref<2x32x256xf32, #tpu.memory_space<vmem>>) attributes {dimension_semantics = [#tpu.dimension_semantics<parallel>], iteration_bounds = array<i64: 1>, scalar_prefetch = 0 : i64, scratch_operands = 0 : i64, tpu.core_type = #tpu.core_type<tc>, window_params = [{transform_indices = @transform_0, window_bounds = array<i64: 2, 32, 256>}, {pipeline_mode = #tpu.pipeline_mode<synchronous>, transform_indices = @transform_1, window_bounds = array<i64: 8, 32>}, {pipeline_mode = #tpu.pipeline_mode<synchronous>, transform_indices = @transform_2, window_bounds = array<i64: 8, 1>}, {pipeline_mode = #tpu.pipeline_mode<synchronous>, transform_indices = @transform_3, window_bounds = array<i64: 32, 8>}, {pipeline_mode = #tpu.pipeline_mode<synchronous>, transform_indices = @transform_4, window_bounds = array<i64: 32, 1>}, {pipeline_mode = #tpu.pipeline_mode<synchronous>, transform_indices = @transform_5, window_bounds = array<i64: 8, 32>}, {pipeline_mode = #tpu.pipeline_mode<synchronous>, transform_indices = @transform_6, window_bounds = array<i64: 8, 1>}, {pipeline_mode = #tpu.pipeline_mode<synchronous>, transform_indices = @transform_7, window_bounds = array<i64: 32, 8>}, {pipeline_mode = #tpu.pipeline_mode<synchronous>, transform_indices = @transform_8, window_bounds = array<i64: 32, 1>}, {transform_indices = @transform_9, window_bounds = array<i64: 2, 32, 256>}]} {
    %c0 = arith.constant 0 : index
    %c0_0 = arith.constant 0 : index
    %0 = vector.load %arg6[%c0, %c0_0] : memref<8x32xf32, #tpu.memory_space<vmem>>, vector<8x32xf32>
    %c0_1 = arith.constant 0 : index
    %c0_2 = arith.constant 0 : index
    %1 = vector.load %arg8[%c0_1, %c0_2] : memref<32x8xf32, #tpu.memory_space<vmem>>, vector<32x8xf32>
    %c0_3 = arith.constant 0 : index
    %c0_4 = arith.constant 0 : index
    %2 = vector.load %arg2[%c0_3, %c0_4] : memref<8x32xf32, #tpu.memory_space<vmem>>, vector<8x32xf32>
    %c0_5 = arith.constant 0 : index
    %c0_6 = arith.constant 0 : index
    %3 = vector.load %arg4[%c0_5, %c0_6] : memref<32x8xf32, #tpu.memory_space<vmem>>, vector<32x8xf32>
    %c0_7 = arith.constant 0 : index
    %c0_8 = arith.constant 0 : index
    %4 = vector.load %arg3[%c0_7, %c0_8] : memref<8x1xf32, #tpu.memory_space<vmem>>, vector<8x1xf32>
    %c0_9 = arith.constant 0 : index
    %c0_10 = arith.constant 0 : index
    %5 = vector.load %arg5[%c0_9, %c0_10] : memref<32x1xf32, #tpu.memory_space<vmem>>, vector<32x1xf32>
    %c0_11 = arith.constant 0 : index
    %c0_12 = arith.constant 0 : index
    %6 = vector.load %arg7[%c0_11, %c0_12] : memref<8x1xf32, #tpu.memory_space<vmem>>, vector<8x1xf32>
    %7 = vector.shape_cast %6 : vector<8x1xf32> to vector<8x1xf32>
    %8 = vector.broadcast %7 : vector<8x1xf32> to vector<8x256xf32>
    %c0_13 = arith.constant 0 : index
    %c0_14 = arith.constant 0 : index
    %9 = vector.load %arg9[%c0_13, %c0_14] : memref<32x1xf32, #tpu.memory_space<vmem>>, vector<32x1xf32>
    %10 = vector.shape_cast %9 : vector<32x1xf32> to vector<32x1xf32>
    %11 = vector.broadcast %10 : vector<32x1xf32> to vector<32x256xf32>
    %c0_i32 = arith.constant 0 : i32
    %c2_i32 = arith.constant 2 : i32
    %12 = arith.addi %c0_i32, %c2_i32 : i32
    %c1_i32 = arith.constant 1 : i32
    scf.for %arg11 = %c0_i32 to %12 step %c1_i32  : i32 {
      %c1_i32_16 = arith.constant 1 : i32
      %13 = arith.muli %arg11, %c1_i32_16 : i32
      %c0_i32_17 = arith.constant 0 : i32
      %14 = arith.addi %c0_i32_17, %13 : i32
      %15 = arith.index_cast %14 : i32 to index
      %c0_18 = arith.constant 0 : index
      %c0_19 = arith.constant 0 : index
      %16 = vector.load %arg1[%15, %c0_18, %c0_19] : memref<2x32x256xf32, #tpu.memory_space<vmem>>, vector<1x32x256xf32>
      %17 = vector.shape_cast %16 : vector<1x32x256xf32> to vector<32x256xf32>
      %cst = arith.constant dense<0.000000e+00> : vector<8x256xf32>
      %18 = tpu.matmul %0, %17, %cst {dimension_numbers = #tpu.dot_dimension_numbers<[1], [0], [0], [1], [0, 0, 1, 1], [], []>} : vector<8x32xf32>, vector<32x256xf32>, vector<8x256xf32> -> vector<8x256xf32>
      %19 = arith.addf %18, %8 : vector<8x256xf32>
      %cst_20 = arith.constant 0.000000e+00 : f32
      %20 = vector.broadcast %cst_20 : f32 to vector<8x256xf32>
      %21 = arith.maximumf %19, %20 : vector<8x256xf32>
      %cst_21 = arith.constant dense<0.000000e+00> : vector<32x256xf32>
      %22 = tpu.matmul %1, %21, %cst_21 {dimension_numbers = #tpu.dot_dimension_numbers<[1], [0], [0], [1], [0, 0, 1, 1], [], []>} : vector<32x8xf32>, vector<8x256xf32>, vector<32x256xf32> -> vector<32x256xf32>
      %23 = arith.addf %22, %11 : vector<32x256xf32>
      %cst_22 = arith.constant 0.000000e+00 : f32
      %24 = vector.broadcast %cst_22 : f32 to vector<32x256xf32>
      %25 = arith.subf %24, %23 : vector<32x256xf32>
      %26 = math.exp %25 : vector<32x256xf32>
      %cst_23 = arith.constant 1.000000e+00 : f32
      %27 = vector.broadcast %cst_23 : f32 to vector<32x256xf32>
      %28 = arith.addf %27, %26 : vector<32x256xf32>
      %29 = tpu.reciprocal %28 : vector<32x256xf32> -> vector<32x256xf32>
      %cst_24 = arith.constant dense<0.000000e+00> : vector<32xf32>
      %30 = vector.multi_reduction <add>, %17, %cst_24 [1] : vector<32x256xf32> to vector<32xf32>
      %31 = vector.shape_cast %30 : vector<32xf32> to vector<32x1xf32>
      %cst_25 = arith.constant dense<0.000000e+00> : vector<8x1xf32>
      %32 = tpu.matmul %2, %31, %cst_25 {dimension_numbers = #tpu.dot_dimension_numbers<[1], [0], [0], [1], [0, 0, 1, 1], [], []>} : vector<8x32xf32>, vector<32x1xf32>, vector<8x1xf32> -> vector<8x1xf32>
      %33 = arith.addf %32, %4 : vector<8x1xf32>
      %cst_26 = arith.constant 0.000000e+00 : f32
      %34 = vector.broadcast %cst_26 : f32 to vector<8x1xf32>
      %35 = arith.maximumf %33, %34 : vector<8x1xf32>
      %cst_27 = arith.constant dense<0.000000e+00> : vector<32x1xf32>
      %36 = tpu.matmul %3, %35, %cst_27 {dimension_numbers = #tpu.dot_dimension_numbers<[1], [0], [0], [1], [0, 0, 1, 1], [], []>} : vector<32x8xf32>, vector<8x1xf32>, vector<32x1xf32> -> vector<32x1xf32>
      %37 = arith.addf %36, %5 : vector<32x1xf32>
      %38 = arith.negf %37 : vector<32x1xf32>
      %39 = math.exp %38 : vector<32x1xf32>
      %cst_28 = arith.constant 1.000000e+00 : f32
      %40 = vector.broadcast %cst_28 : f32 to vector<32x1xf32>
      %41 = arith.addf %40, %39 : vector<32x1xf32>
      %42 = arith.divf %40, %41 : vector<32x1xf32>
      %43 = vector.broadcast %42 : vector<32x1xf32> to vector<32x256xf32>
      %44 = arith.mulf %17, %43 : vector<32x256xf32>
      %45 = arith.mulf %44, %29 : vector<32x256xf32>
      %46 = arith.index_cast %14 : i32 to index
      %c0_29 = arith.constant 0 : index
      %c0_30 = arith.constant 0 : index
      %47 = vector.load %arg10[%46, %c0_29, %c0_30] : memref<2x32x256xf32, #tpu.memory_space<vmem>>, vector<1x32x256xf32>
      %48 = vector.shape_cast %47 : vector<1x32x256xf32> to vector<32x256xf32>
      %49 = vector.shape_cast %45 : vector<32x256xf32> to vector<1x32x256xf32>
      tpu.vector_store %arg10[%46, %c0_29, %c0_30], %49 {strides = array<i32>} : memref<2x32x256xf32, #tpu.memory_space<vmem>>, vector<1x32x256xf32>,
    }
    %c2_i32_15 = arith.constant 2 : i32
    return
  }
  func.func @transform_0(%arg0: i32) -> (i32, i32, i32) {
    %c0_i32 = arith.constant 0 : i32
    %c0_i32_0 = arith.constant 0 : i32
    %c0_i32_1 = arith.constant 0 : i32
    return %arg0, %c0_i32, %c0_i32_0 : i32, i32, i32
  }
  func.func @transform_1(%arg0: i32) -> (i32, i32) {
    %c0_i32 = arith.constant 0 : i32
    %c0_i32_0 = arith.constant 0 : i32
    %c0_i32_1 = arith.constant 0 : i32
    return %c0_i32, %c0_i32_0 : i32, i32
  }
  func.func @transform_2(%arg0: i32) -> (i32, i32) {
    %c0_i32 = arith.constant 0 : i32
    %c0_i32_0 = arith.constant 0 : i32
    %c0_i32_1 = arith.constant 0 : i32
    return %c0_i32, %c0_i32_0 : i32, i32
  }
  func.func @transform_3(%arg0: i32) -> (i32, i32) {
    %c0_i32 = arith.constant 0 : i32
    %c0_i32_0 = arith.constant 0 : i32
    %c0_i32_1 = arith.constant 0 : i32
    return %c0_i32, %c0_i32_0 : i32, i32
  }
  func.func @transform_4(%arg0: i32) -> (i32, i32) {
    %c0_i32 = arith.constant 0 : i32
    %c0_i32_0 = arith.constant 0 : i32
    %c0_i32_1 = arith.constant 0 : i32
    return %c0_i32, %c0_i32_0 : i32, i32
  }
  func.func @transform_5(%arg0: i32) -> (i32, i32) {
    %c0_i32 = arith.constant 0 : i32
    %c0_i32_0 = arith.constant 0 : i32
    %c0_i32_1 = arith.constant 0 : i32
    return %c0_i32, %c0_i32_0 : i32, i32
  }
  func.func @transform_6(%arg0: i32) -> (i32, i32) {
    %c0_i32 = arith.constant 0 : i32
    %c0_i32_0 = arith.constant 0 : i32
    %c0_i32_1 = arith.constant 0 : i32
    return %c0_i32, %c0_i32_0 : i32, i32
  }
  func.func @transform_7(%arg0: i32) -> (i32, i32) {
    %c0_i32 = arith.constant 0 : i32
    %c0_i32_0 = arith.constant 0 : i32
    %c0_i32_1 = arith.constant 0 : i32
    return %c0_i32, %c0_i32_0 : i32, i32
  }
  func.func @transform_8(%arg0: i32) -> (i32, i32) {
    %c0_i32 = arith.constant 0 : i32
    %c0_i32_0 = arith.constant 0 : i32
    %c0_i32_1 = arith.constant 0 : i32
    return %c0_i32, %c0_i32_0 : i32, i32
  }
  func.func @transform_9(%arg0: i32) -> (i32, i32, i32) {
    %c0_i32 = arith.constant 0 : i32
    %c0_i32_0 = arith.constant 0 : i32
    %c0_i32_1 = arith.constant 0 : i32
    return %arg0, %c0_i32, %c0_i32_0 : i32, i32, i32
  }
}

</mosaic_0001>

<llo_original>
// kernel: tpu_custom_call.1
$region0: #{tpu_custom_call.1}
  #allocation0 [shape = 'u32[]', space=smem, size = 0x4, offset = 0x4, fixed_abs, tag = 'smem constant byte address 0x4 - core index']
  #allocation1 [shape = 'u32[144,128]{1,0:T(1,128)}', space=vmem, size = 0x12000, scoped, tag = 'internal scratch']
  %s0 = inlined_call_operand.vmem [shape: f32[2,32,256], index: 0, kind: input, shape index: {}]
  %s1 = inlined_call_operand.vmem [shape: f32[8,32], index: 1, kind: input, shape index: {}]
  %s2 = inlined_call_operand.vmem [shape: f32[8,1], index: 2, kind: input, shape index: {}]
  %s3 = inlined_call_operand.vmem [shape: f32[32,8], index: 3, kind: input, shape index: {}]
  %s4 = inlined_call_operand.vmem [shape: f32[32,1], index: 4, kind: input, shape index: {}]
  %s5 = inlined_call_operand.vmem [shape: f32[8,32], index: 5, kind: input, shape index: {}]
  %s6 = inlined_call_operand.vmem [shape: f32[8,1], index: 6, kind: input, shape index: {}]
  %s7 = inlined_call_operand.vmem [shape: f32[32,8], index: 7, kind: input, shape index: {}]
  %s8 = inlined_call_operand.vmem [shape: f32[32,1], index: 8, kind: input, shape index: {}]
  %s9 = inlined_call_operand.hbm [shape: f32[2,32,256], index: 9, kind: output, shape index: {}]
  %s10 = sld [smem:[#allocation0]]
  $region53: #{tpu_custom_call.1} parent=0
    _
  %s12 = ssub.s32 1, %s10
  %s13 = scalar_select 0, %s12, %s10
  $region1: #{tpu_custom_call.1} parent=0
    #allocation2 [shape = 'u8[65536]{0}', space=vmem, size = 0x10000, scoped, tag = 'output window, operand 0, single buffered']
    #allocation3 [shape = 's32[1]{0}', space=sflag, size = 0x4, scoped, tag = 'scoped memory for tpu_custom_call.1']
    %14 = vsyncpa [#allocation3], 0
    // Predicated region
    $region2: #{tpu_custom_call.1} parent=1 // pred_check
      _
    $region3: #{tpu_custom_call.1} parent=1 // pred_check_branch
      %16 = sbr.rel (0) target = $region5
    $region4: #{tpu_custom_call.1} parent=1 // pred_region
      _
    $region5: #{tpu_custom_call.1} parent=1 // pred_fallthru
      _
    // Predicated region
    $region6: #{tpu_custom_call.1} parent=1 // pred_check
      _
    $region7: #{tpu_custom_call.1} parent=1 // pred_check_branch
      %18 = sbr.rel (0) target = $region9
    $region8: #{tpu_custom_call.1} parent=1 // pred_region
      _
    $region9: #{tpu_custom_call.1} parent=1 // pred_fallthru
      _
    // Predicated region
    $region10: #{tpu_custom_call.1} parent=1 // pred_check
      _
    $region11: #{tpu_custom_call.1} parent=1 // pred_check_branch
      %20 = sbr.rel (0) target = $region13
    $region12: #{tpu_custom_call.1} parent=1 // pred_region
      _
    $region13: #{tpu_custom_call.1} parent=1 // pred_fallthru
      _
    // Predicated region
    $region14: #{tpu_custom_call.1} parent=1 // pred_check
      _
    $region15: #{tpu_custom_call.1} parent=1 // pred_check_branch
      %22 = sbr.rel (0) target = $region17
    $region16: #{tpu_custom_call.1} parent=1 // pred_region
      _
    $region17: #{tpu_custom_call.1} parent=1 // pred_fallthru
      _
    // Predicated region
    $region18: #{tpu_custom_call.1} parent=1 // pred_check
      _
    $region19: #{tpu_custom_call.1} parent=1 // pred_check_branch
      %24 = sbr.rel (0) target = $region21
    $region20: #{tpu_custom_call.1} parent=1 // pred_region
      _
    $region21: #{tpu_custom_call.1} parent=1 // pred_fallthru
      _
    // Predicated region
    $region22: #{tpu_custom_call.1} parent=1 // pred_check
      _
    $region23: #{tpu_custom_call.1} parent=1 // pred_check_branch
      %26 = sbr.rel (0) target = $region25
    $region24: #{tpu_custom_call.1} parent=1 // pred_region
      _
    $region25: #{tpu_custom_call.1} parent=1 // pred_fallthru
      _
    // Predicated region
    $region26: #{tpu_custom_call.1} parent=1 // pred_check
      _
    $region27: #{tpu_custom_call.1} parent=1 // pred_check_branch
      %28 = sbr.rel (0) target = $region29
    $region28: #{tpu_custom_call.1} parent=1 // pred_region
      _
    $region29: #{tpu_custom_call.1} parent=1 // pred_fallthru
      _
    // Predicated region
    $region30: #{tpu_custom_call.1} parent=1 // pred_check
      _
    $region31: #{tpu_custom_call.1} parent=1 // pred_check_branch
      %30 = sbr.rel (0) target = $region33
    $region32: #{tpu_custom_call.1} parent=1 // pred_region
      _
    $region33: #{tpu_custom_call.1} parent=1 // pred_fallthru
      _
    // Predicated region
    $region34: #{tpu_custom_call.1} parent=1 // pred_check
      _
    $region35: #{tpu_custom_call.1} parent=1 // pred_check_branch
      %32 = sbr.rel (0) target = $region37
    $region36: #{tpu_custom_call.1} parent=1 // pred_region
      _
    $region37: #{tpu_custom_call.1} parent=1 // pred_fallthru
      _
    %v33 = vld [vmem:[%s5] sm:$0xff]
    %v34 = vld [vmem:[%s7] sm:$0xff]
    %v35 = vld [vmem:[%s7 + $0x8] sm:$0xff]
    %v36 = vld [vmem:[%s7 + $0x10] sm:$0xff]
    %v37 = vld [vmem:[%s7 + $0x18] sm:$0xff]
    %v38 = vld [vmem:[%s1] sm:$0xff]
    %v39 = vld [vmem:[%s3] sm:$0xff]
    %v40 = vld [vmem:[%s3 + $0x8] sm:$0xff]
    %v41 = vld [vmem:[%s3 + $0x10] sm:$0xff]
    %v42 = vld [vmem:[%s3 + $0x18] sm:$0xff]
    %v43 = vld [vmem:[%s2] sm:$0xff]
    %v44 = vld [vmem:[%s4] sm:$0xff]
    %v45 = vld [vmem:[%s4 + $0x8] sm:$0xff]
    %v46 = vld [vmem:[%s4 + $0x10] sm:$0xff]
    %v47 = vld [vmem:[%s4 + $0x18] sm:$0xff]
    %v48 = vld [vmem:[%s6] sm:$0xff]
    %50 = vset.pattern.permute.xlu0 0
    %51 = vperm.xlu0 %50, %v48
    %v52 = vpop.permute.xlu0 %51
    %v54 = vld [vmem:[%s8] sm:$0xff]
    %v55 = vld [vmem:[%s8 + $0x8] sm:$0xff]
    %v56 = vld [vmem:[%s8 + $0x10] sm:$0xff]
    %v57 = vld [vmem:[%s8 + $0x18] sm:$0xff]
    %59 = vset.pattern.permute.xlu0 0
    %60 = vperm.xlu0 %59, %v54
    %v61 = vpop.permute.xlu0 %60
    %64 = vset.pattern.permute.xlu0 0
    %65 = vperm.xlu0 %64, %v55
    %v66 = vpop.permute.xlu0 %65
    %69 = vset.pattern.permute.xlu0 0
    %70 = vperm.xlu0 %69, %v56
    %v71 = vpop.permute.xlu0 %70
    %74 = vset.pattern.permute.xlu0 0
    %75 = vperm.xlu0 %74, %v57
    %v76 = vpop.permute.xlu0 %75
    loop: start=0, step=1, limit=2
    $region38: #{tpu_custom_call.1} parent=1 // loop_pre_header
      _
    $region39: #{tpu_custom_call.1} parent=1 // loop_header
      %s79 = sphi 0, %s83
      %p80 = scmp.ge.s32.totalorder %s79, 2
    $region40: #{tpu_custom_call.1} parent=1 // loop_header_branch
      %82 = sbr.rel (%p80) target = $region44
    $region41: #{tpu_custom_call.1} parent=1 // loop_body
      %s84 = smul.u32 %s79, 8
      %s85 = smul.addr %s84, 8
      %s86 = scalar_lea.vmem %s0, %s85
      %v87 = vld [vmem:[%s86] sm:$0xff]
      %v88 = vld [vmem:[%s86 + $0x8] sm:$0xff]
      %v89 = vld [vmem:[%s86 + $0x10] sm:$0xff]
      %v90 = vld [vmem:[%s86 + $0x18] sm:$0xff]
      %v91 = vld [vmem:[%s86 + $0x20] sm:$0xff]
      %v92 = vld [vmem:[%s86 + $0x28] sm:$0xff]
      %v93 = vld [vmem:[%s86 + $0x30] sm:$0xff]
      %v94 = vld [vmem:[%s86 + $0x38] sm:$0xff]
      %vm95 = vcmask 261120
      %v97 = vsel %vm95, %v33, 0
      %99 = vmatprep.subr.mxu0 %v88
      %100 = vmatpush1.msra.mxu0 %v87
      %101 = vmatprep.subr.mxu0 %v90
      %102 = vmatpush1.msra.mxu0 %v89
      %103 = vmatprep.subr.mxu0 %v92
      %104 = vmatpush1.msra.mxu0 %v91
      %105 = vmatprep.subr.mxu0 %v94
      %106 = vmatpush1.msra.mxu0 %v93
      %107 = vmatprep.subr.mxu0 0.0
      %108 = vmatpush1.msra.mxu0 0.0
      %109 = vmatprep.subr.mxu0 0.0
      %110 = vmatpush1.msra.mxu0 0.0
      %111 = vmatprep.subr.mxu0 0.0
      %112 = vmatpush1.msra.mxu0 0.0
      %113 = vmatprep.subr.mxu0 0.0
      %114 = vmatpush1.msra.mxu0 0.0
      %115 = vmatprep.subr.mxu0 0.0
      %116 = vmatpush1.msra.mxu0 0.0
      %117 = vmatprep.subr.mxu0 0.0
      %118 = vmatpush1.msra.mxu0 0.0
      %119 = vmatprep.subr.mxu0 0.0
      %120 = vmatpush1.msra.mxu0 0.0
      %121 = vmatprep.subr.mxu0 0.0
      %122 = vmatpush1.msra.mxu0 0.0
      %123 = vmatprep.subr.mxu0 0.0
      %124 = vmatpush1.msra.mxu0 0.0
      %125 = vmatprep.subr.mxu0 0.0
      %126 = vmatpush1.msra.mxu0 0.0
      %127 = vmatprep.subr.mxu0 0.0
      %128 = vmatpush1.msra.mxu0 0.0
      %129 = vmatprep.subr.mxu0 0.0
      %130 = vmatpush1.msra.mxu0 0.0
      %131 = vmatprep.subr.mxu0 0.0
      %132 = vmatpush1.msra.mxu0 0.0
      %133 = vmatprep.subr.mxu0 0.0
      %134 = vmatpush1.msra.mxu0 0.0
      %135 = vmatprep.subr.mxu0 0.0
      %136 = vmatpush1.msra.mxu0 0.0
      %137 = vmatprep.subr.mxu0 0.0
      %138 = vmatpush1.msra.mxu0 0.0
      %139 = vmatprep.subr.mxu0 0.0
      %140 = vmatpush1.msra.mxu0 0.0
      %141 = vmatprep.subr.mxu0 0.0
      %142 = vmatpush1.msra.mxu0 0.0
      %143 = vmatprep.subr.mxu0 0.0
      %144 = vmatpush1.msra.mxu0 0.0
      %145 = vmatprep.subr.mxu0 0.0
      %146 = vmatpush1.msra.mxu0 0.0
      %147 = vmatprep.subr.mxu0 0.0
      %148 = vmatpush1.msra.mxu0 0.0
      %149 = vmatprep.subr.mxu0 0.0
      %150 = vmatpush1.msra.mxu0 0.0
      %151 = vmatprep.subr.mxu0 0.0
      %152 = vmatpush1.msra.mxu0 0.0
      %153 = vmatprep.subr.mxu0 0.0
      %154 = vmatpush1.msra.mxu0 0.0
      %155 = vmatprep.subr.mxu0 0.0
      %156 = vmatpush1.msra.mxu0 0.0
      %157 = vmatprep.subr.mxu0 0.0
      %158 = vmatpush1.msra.mxu0 0.0
      %159 = vmatprep.subr.mxu0 0.0
      %160 = vmatpush1.msra.mxu0 0.0
      %161 = vmatprep.subr.mxu0 0.0
      %162 = vmatpush1.msra.mxu0 0.0
      %163 = vmatprep.mubr.f32.mxu0 0.0
      %164 = vmatmul.mubr.f32.gmra.mrb[0].mxu0 %v97
      %v165 = vpop.f32.mrb[0].mxu0
      %v166 = vadd.f32 %v52, %v165
      %v167 = vpop.f32.mrb[0].mxu0
      %v168 = vadd.f32 %v52, %v167
      %169 = vdwg.mxu0
      %v170 = vmax.f32 %v166, 0.0
      %v171 = vmax.f32 %v168, 0.0
      %vm172 = vcmask 64512
      %v174 = vsel %vm172, %v34, 0
      %v177 = vsel %vm172, %v35, 0
      %v180 = vsel %vm172, %v36, 0
      %v183 = vsel %vm172, %v37, 0
      %185 = vmatprep.subr.mxu0 %v171
      %186 = vmatpush1.msra.mxu0 %v170
      %187 = vmatprep.subr.mxu0 0.0
      %188 = vmatpush1.msra.mxu0 0.0
      %189 = vmatprep.subr.mxu0 0.0
      %190 = vmatpush1.msra.mxu0 0.0
      %191 = vmatprep.subr.mxu0 0.0
      %192 = vmatpush1.msra.mxu0 0.0
      %193 = vmatprep.subr.mxu0 0.0
      %194 = vmatpush1.msra.mxu0 0.0
      %195 = vmatprep.subr.mxu0 0.0
      %196 = vmatpush1.msra.mxu0 0.0
      %197 = vmatprep.subr.mxu0 0.0
      %198 = vmatpush1.msra.mxu0 0.0
      %199 = vmatprep.subr.mxu0 0.0
      %200 = vmatpush1.msra.mxu0 0.0
      %201 = vmatprep.subr.mxu0 0.0
      %202 = vmatpush1.msra.mxu0 0.0
      %203 = vmatprep.subr.mxu0 0.0
      %204 = vmatpush1.msra.mxu0 0.0
      %205 = vmatprep.subr.mxu0 0.0
      %206 = vmatpush1.msra.mxu0 0.0
      %207 = vmatprep.subr.mxu0 0.0
      %208 = vmatpush1.msra.mxu0 0.0
      %209 = vmatprep.subr.mxu0 0.0
      %210 = vmatpush1.msra.mxu0 0.0
      %211 = vmatprep.subr.mxu0 0.0
      %212 = vmatpush1.msra.mxu0 0.0
      %213 = vmatprep.subr.mxu0 0.0
      %214 = vmatpush1.msra.mxu0 0.0
      %215 = vmatprep.subr.mxu0 0.0
      %216 = vmatpush1.msra.mxu0 0.0
      %217 = vmatprep.subr.mxu0 0.0
      %218 = vmatpush1.msra.mxu0 0.0
      %219 = vmatprep.subr.mxu0 0.0
      %220 = vmatpush1.msra.mxu0 0.0
      %221 = vmatprep.subr.mxu0 0.0
      %222 = vmatpush1.msra.mxu0 0.0
      %223 = vmatprep.subr.mxu0 0.0
      %224 = vmatpush1.msra.mxu0 0.0
      %225 = vmatprep.subr.mxu0 0.0
      %226 = vmatpush1.msra.mxu0 0.0
      %227 = vmatprep.subr.mxu0 0.0
      %228 = vmatpush1.msra.mxu0 0.0
      %229 = vmatprep.subr.mxu0 0.0
      %230 = vmatpush1.msra.mxu0 0.0
      %231 = vmatprep.subr.mxu0 0.0
      %232 = vmatpush1.msra.mxu0 0.0
      %233 = vmatprep.subr.mxu0 0.0
      %234 = vmatpush1.msra.mxu0 0.0
      %235 = vmatprep.subr.mxu0 0.0
      %236 = vmatpush1.msra.mxu0 0.0
      %237 = vmatprep.subr.mxu0 0.0
      %238 = vmatpush1.msra.mxu0 0.0
      %239 = vmatprep.subr.mxu0 0.0
      %240 = vmatpush1.msra.mxu0 0.0
      %241 = vmatprep.subr.mxu0 0.0
      %242 = vmatpush1.msra.mxu0 0.0
      %243 = vmatprep.subr.mxu0 0.0
      %244 = vmatpush1.msra.mxu0 0.0
      %245 = vmatprep.subr.mxu0 0.0
      %246 = vmatpush1.msra.mxu0 0.0
      %247 = vmatprep.subr.mxu0 0.0
      %248 = vmatpush1.msra.mxu0 0.0
      %249 = vmatprep.mubr.f32.mxu0 0.0
      %250 = vmatmul.mubr.f32.gmra.mrb[0].mxu0 %v174
      %v251 = vpop.f32.mrb[0].mxu0
      %v252 = vadd.f32 %v61, %v251
      %v253 = vpop.f32.mrb[0].mxu0
      %v254 = vadd.f32 %v61, %v253
      %255 = vmatprep.mubr.f32.mxu0 0.0
      %256 = vmatmul.mubr.f32.gmra.mrb[0].mxu0 %v177
      %v257 = vpop.f32.mrb[0].mxu0
      %v258 = vadd.f32 %v66, %v257
      %v259 = vpop.f32.mrb[0].mxu0
      %v260 = vadd.f32 %v66, %v259
      %261 = vmatprep.mubr.f32.mxu0 0.0
      %262 = vmatmul.mubr.f32.gmra.mrb[0].mxu0 %v180
      %v263 = vpop.f32.mrb[0].mxu0
      %v264 = vadd.f32 %v71, %v263
      %v265 = vpop.f32.mrb[0].mxu0
      %v266 = vadd.f32 %v71, %v265
      %267 = vmatprep.mubr.f32.mxu0 0.0
      %268 = vmatmul.mubr.f32.gmra.mrb[0].mxu0 %v183
      %v269 = vpop.f32.mrb[0].mxu0
      %v270 = vadd.f32 %v76, %v269
      %v271 = vpop.f32.mrb[0].mxu0
      %v272 = vadd.f32 %v76, %v271
      %273 = vdwg.mxu0
      %v274 = vsub.f32 0.0, %v252
      %v275 = vsub.f32 0.0, %v254
      %v276 = vsub.f32 0.0, %v258
      %v277 = vsub.f32 0.0, %v260
      %v278 = vsub.f32 0.0, %v264
      %v279 = vsub.f32 0.0, %v266
      %v280 = vsub.f32 0.0, %v270
      %v281 = vsub.f32 0.0, %v272
      %v282 = vmul.f32 %v274, 1.442695
      %v283 = vpow.pop %v282
      %v284 = vmul.f32 %v275, 1.442695
      %v285 = vpow.pop %v284
      %v286 = vmul.f32 %v276, 1.442695
      %v287 = vpow.pop %v286
      %v288 = vmul.f32 %v277, 1.442695
      %v289 = vpow.pop %v288
      %v290 = vmul.f32 %v278, 1.442695
      %v291 = vpow.pop %v290
      %v292 = vmul.f32 %v279, 1.442695
      %v293 = vpow.pop %v292
      %v294 = vmul.f32 %v280, 1.442695
      %v295 = vpow.pop %v294
      %v296 = vmul.f32 %v281, 1.442695
      %v297 = vpow.pop %v296
      %v298 = vadd.f32 %v283, 1.0
      %v299 = vadd.f32 %v285, 1.0
      %v300 = vadd.f32 %v287, 1.0
      %v301 = vadd.f32 %v289, 1.0
      %v302 = vadd.f32 %v291, 1.0
      %v303 = vadd.f32 %v293, 1.0
      %v304 = vadd.f32 %v295, 1.0
      %v305 = vadd.f32 %v297, 1.0
      %v306 = vrcp.pop %v298
      %v307 = vrcp.pop %v299
      %v308 = vrcp.pop %v300
      %v309 = vrcp.pop %v301
      %v310 = vrcp.pop %v302
      %v311 = vrcp.pop %v303
      %v312 = vrcp.pop %v304
      %v313 = vrcp.pop %v305
      %v314 = vadd.f32 %v87, %v88
      %315 = vadd.xlane.f32.xlu0 %v314
      %v316 = vpop.xlane.xlu0 %315
      %v317 = vadd.f32 %v89, %v90
      %318 = vadd.xlane.f32.xlu0 %v317
      %v319 = vpop.xlane.xlu0 %318
      %v320 = vadd.f32 %v91, %v92
      %321 = vadd.xlane.f32.xlu0 %v320
      %v322 = vpop.xlane.xlu0 %321
      %v323 = vadd.f32 %v93, %v94
      %324 = vadd.xlane.f32.xlu0 %v323
      %v325 = vpop.xlane.xlu0 %324
      %v327 = vsel %vm95, %v38, 0
      %329 = vmatprep.subr.mxu0 0.0
      %330 = vmatpush1.msra.mxu0 %v316
      %331 = vmatprep.subr.mxu0 0.0
      %332 = vmatpush1.msra.mxu0 %v319
      %333 = vmatprep.subr.mxu0 0.0
      %334 = vmatpush1.msra.mxu0 %v322
      %335 = vmatprep.subr.mxu0 0.0
      %336 = vmatpush1.msra.mxu0 %v325
      %337 = vmatprep.subr.mxu0 0.0
      %338 = vmatpush1.msra.mxu0 0.0
      %339 = vmatprep.subr.mxu0 0.0
      %340 = vmatpush1.msra.mxu0 0.0
      %341 = vmatprep.subr.mxu0 0.0
      %342 = vmatpush1.msra.mxu0 0.0
      %343 = vmatprep.subr.mxu0 0.0
      %344 = vmatpush1.msra.mxu0 0.0
      %345 = vmatprep.subr.mxu0 0.0
      %346 = vmatpush1.msra.mxu0 0.0
      %347 = vmatprep.subr.mxu0 0.0
      %348 = vmatpush1.msra.mxu0 0.0
      %349 = vmatprep.subr.mxu0 0.0
      %350 = vmatpush1.msra.mxu0 0.0
      %351 = vmatprep.subr.mxu0 0.0
      %352 = vmatpush1.msra.mxu0 0.0
      %353 = vmatprep.subr.mxu0 0.0
      %354 = vmatpush1.msra.mxu0 0.0
      %355 = vmatprep.subr.mxu0 0.0
      %356 = vmatpush1.msra.mxu0 0.0
      %357 = vmatprep.subr.mxu0 0.0
      %358 = vmatpush1.msra.mxu0 0.0
      %359 = vmatprep.subr.mxu0 0.0
      %360 = vmatpush1.msra.mxu0 0.0
      %361 = vmatprep.subr.mxu0 0.0
      %362 = vmatpush1.msra.mxu0 0.0
      %363 = vmatprep.subr.mxu0 0.0
      %364 = vmatpush1.msra.mxu0 0.0
      %365 = vmatprep.subr.mxu0 0.0
      %366 = vmatpush1.msra.mxu0 0.0
      %367 = vmatprep.subr.mxu0 0.0
      %368 = vmatpush1.msra.mxu0 0.0
      %369 = vmatprep.subr.mxu0 0.0
      %370 = vmatpush1.msra.mxu0 0.0
      %371 = vmatprep.subr.mxu0 0.0
      %372 = vmatpush1.msra.mxu0 0.0
      %373 = vmatprep.subr.mxu0 0.0
      %374 = vmatpush1.msra.mxu0 0.0
      %375 = vmatprep.subr.mxu0 0.0
      %376 = vmatpush1.msra.mxu0 0.0
      %377 = vmatprep.subr.mxu0 0.0
      %378 = vmatpush1.msra.mxu0 0.0
      %379 = vmatprep.subr.mxu0 0.0
      %380 = vmatpush1.msra.mxu0 0.0
      %381 = vmatprep.subr.mxu0 0.0
      %382 = vmatpush1.msra.mxu0 0.0
      %383 = vmatprep.subr.mxu0 0.0
      %384 = vmatpush1.msra.mxu0 0.0
      %385 = vmatprep.subr.mxu0 0.0
      %386 = vmatpush1.msra.mxu0 0.0
      %387 = vmatprep.subr.mxu0 0.0
      %388 = vmatpush1.msra.mxu0 0.0
      %389 = vmatprep.subr.mxu0 0.0
      %390 = vmatpush1.msra.mxu0 0.0
      %391 = vmatprep.subr.mxu0 0.0
      %392 = vmatpush1.msra.mxu0 0.0
      %393 = vmatprep.mubr.f32.mxu0 0.0
      %394 = vmatmul.mubr.f32.gmra.mrb[0].mxu0 %v327
      %v395 = vpop.f32.mrb[0].mxu0
      %v396 = vadd.f32 %v43, %v395
      %v397 = vpop.f32.mrb[0].mxu0
      %398 = vdwg.mxu0
      %v399 = vmax.f32 %v396, 0.0
      %v401 = vsel %vm172, %v39, 0
      %v404 = vsel %vm172, %v40, 0
      %v407 = vsel %vm172, %v41, 0
      %v410 = vsel %vm172, %v42, 0
      %412 = vmatprep.subr.mxu0 0.0
      %413 = vmatpush1.msra.mxu0 %v399
      %414 = vmatprep.subr.mxu0 0.0
      %415 = vmatpush1.msra.mxu0 0.0
      %416 = vmatprep.subr.mxu0 0.0
      %417 = vmatpush1.msra.mxu0 0.0
      %418 = vmatprep.subr.mxu0 0.0
      %419 = vmatpush1.msra.mxu0 0.0
      %420 = vmatprep.subr.mxu0 0.0
      %421 = vmatpush1.msra.mxu0 0.0
      %422 = vmatprep.subr.mxu0 0.0
      %423 = vmatpush1.msra.mxu0 0.0
      %424 = vmatprep.subr.mxu0 0.0
      %425 = vmatpush1.msra.mxu0 0.0
      %426 = vmatprep.subr.mxu0 0.0
      %427 = vmatpush1.msra.mxu0 0.0
      %428 = vmatprep.subr.mxu0 0.0
      %429 = vmatpush1.msra.mxu0 0.0
      %430 = vmatprep.subr.mxu0 0.0
      %431 = vmatpush1.msra.mxu0 0.0
      %432 = vmatprep.subr.mxu0 0.0
      %433 = vmatpush1.msra.mxu0 0.0
      %434 = vmatprep.subr.mxu0 0.0
      %435 = vmatpush1.msra.mxu0 0.0
      %436 = vmatprep.subr.mxu0 0.0
      %437 = vmatpush1.msra.mxu0 0.0
      %438 = vmatprep.subr.mxu0 0.0
      %439 = vmatpush1.msra.mxu0 0.0
      %440 = vmatprep.subr.mxu0 0.0
      %441 = vmatpush1.msra.mxu0 0.0
      %442 = vmatprep.subr.mxu0 0.0
      %443 = vmatpush1.msra.mxu0 0.0
      %444 = vmatprep.subr.mxu0 0.0
      %445 = vmatpush1.msra.mxu0 0.0
      %446 = vmatprep.subr.mxu0 0.0
      %447 = vmatpush1.msra.mxu0 0.0
      %448 = vmatprep.subr.mxu0 0.0
      %449 = vmatpush1.msra.mxu0 0.0
      %450 = vmatprep.subr.mxu0 0.0
      %451 = vmatpush1.msra.mxu0 0.0
      %452 = vmatprep.subr.mxu0 0.0
      %453 = vmatpush1.msra.mxu0 0.0
      %454 = vmatprep.subr.mxu0 0.0
      %455 = vmatpush1.msra.mxu0 0.0
      %456 = vmatprep.subr.mxu0 0.0
      %457 = vmatpush1.msra.mxu0 0.0
      %458 = vmatprep.subr.mxu0 0.0
      %459 = vmatpush1.msra.mxu0 0.0
      %460 = vmatprep.subr.mxu0 0.0
      %461 = vmatpush1.msra.mxu0 0.0
      %462 = vmatprep.subr.mxu0 0.0
      %463 = vmatpush1.msra.mxu0 0.0
      %464 = vmatprep.subr.mxu0 0.0
      %465 = vmatpush1.msra.mxu0 0.0
      %466 = vmatprep.subr.mxu0 0.0
      %467 = vmatpush1.msra.mxu0 0.0
      %468 = vmatprep.subr.mxu0 0.0
      %469 = vmatpush1.msra.mxu0 0.0
      %470 = vmatprep.subr.mxu0 0.0
      %471 = vmatpush1.msra.mxu0 0.0
      %472 = vmatprep.subr.mxu0 0.0
      %473 = vmatpush1.msra.mxu0 0.0
      %474 = vmatprep.subr.mxu0 0.0
      %475 = vmatpush1.msra.mxu0 0.0
      %476 = vmatprep.mubr.f32.mxu0 0.0
      %477 = vmatmul.mubr.f32.gmra.mrb[0].mxu0 %v401
      %v478 = vpop.f32.mrb[0].mxu0
      %v479 = vadd.f32 %v44, %v478
      %v480 = vpop.f32.mrb[0].mxu0
      %481 = vmatprep.mubr.f32.mxu0 0.0
      %482 = vmatmul.mubr.f32.gmra.mrb[0].mxu0 %v404
      %v483 = vpop.f32.mrb[0].mxu0
      %v484 = vadd.f32 %v45, %v483
      %v485 = vpop.f32.mrb[0].mxu0
      %486 = vmatprep.mubr.f32.mxu0 0.0
      %487 = vmatmul.mubr.f32.gmra.mrb[0].mxu0 %v407
      %v488 = vpop.f32.mrb[0].mxu0
      %v489 = vadd.f32 %v46, %v488
      %v490 = vpop.f32.mrb[0].mxu0
      %491 = vmatprep.mubr.f32.mxu0 0.0
      %492 = vmatmul.mubr.f32.gmra.mrb[0].mxu0 %v410
      %v493 = vpop.f32.mrb[0].mxu0
      %v494 = vadd.f32 %v47, %v493
      %v495 = vpop.f32.mrb[0].mxu0
      %496 = vdwg.mxu0
      %v497 = vxor.u32 %v479, 2147483648
      %v498 = vxor.u32 %v484, 2147483648
      %v499 = vxor.u32 %v489, 2147483648
      %v500 = vxor.u32 %v494, 2147483648
      %v501 = vmul.f32 %v497, 1.442695
      %v502 = vpow.pop %v501
      %v503 = vmul.f32 %v498, 1.442695
      %v504 = vpow.pop %v503
      %v505 = vmul.f32 %v499, 1.442695
      %v506 = vpow.pop %v505
      %v507 = vmul.f32 %v500, 1.442695
      %v508 = vpow.pop %v507
      %v509 = vadd.f32 %v502, 1.0
      %v510 = vadd.f32 %v504, 1.0
      %v511 = vadd.f32 %v506, 1.0
      %v512 = vadd.f32 %v508, 1.0
      %v513 = vrcp.pop %v509
      %v514 = vmul.f32 1.0, %v513
      %v515 = vrcp.pop %v510
      %v516 = vmul.f32 1.0, %v515
      %v517 = vrcp.pop %v511
      %v518 = vmul.f32 1.0, %v517
      %v519 = vrcp.pop %v512
      %v520 = vmul.f32 1.0, %v519
      %522 = vset.pattern.permute.xlu0 0
      %523 = vperm.xlu0 %522, %v514
      %v524 = vpop.permute.xlu0 %523
      %527 = vset.pattern.permute.xlu0 0
      %528 = vperm.xlu0 %527, %v516
      %v529 = vpop.permute.xlu0 %528
      %532 = vset.pattern.permute.xlu0 0
      %533 = vperm.xlu0 %532, %v518
      %v534 = vpop.permute.xlu0 %533
      %537 = vset.pattern.permute.xlu0 0
      %538 = vperm.xlu0 %537, %v520
      %v539 = vpop.permute.xlu0 %538
      %v541 = vmul.f32 %v87, %v524
      %v542 = vmul.f32 %v88, %v524
      %v543 = vmul.f32 %v89, %v529
      %v544 = vmul.f32 %v90, %v529
      %v545 = vmul.f32 %v91, %v534
      %v546 = vmul.f32 %v92, %v534
      %v547 = vmul.f32 %v93, %v539
      %v548 = vmul.f32 %v94, %v539
      %v549 = vmul.f32 %v541, %v306
      %v550 = vmul.f32 %v542, %v307
      %v551 = vmul.f32 %v543, %v308
      %v552 = vmul.f32 %v544, %v309
      %v553 = vmul.f32 %v545, %v310
      %v554 = vmul.f32 %v546, %v311
      %v555 = vmul.f32 %v547, %v312
      %v556 = vmul.f32 %v548, %v313
      %s557 = smul.addr %s84, 8
      %s558 = scalar_lea.vmem [#allocation2], %s557
      %559 = vst [vmem:[%s558] sm:$0xff] %v549
      %560 = vst [vmem:[%s558 + $0x8] sm:$0xff] %v550
      %561 = vst [vmem:[%s558 + $0x10] sm:$0xff] %v551
      %562 = vst [vmem:[%s558 + $0x18] sm:$0xff] %v552
      %563 = vst [vmem:[%s558 + $0x20] sm:$0xff] %v553
      %564 = vst [vmem:[%s558 + $0x28] sm:$0xff] %v554
      %565 = vst [vmem:[%s558 + $0x30] sm:$0xff] %v555
      %566 = vst [vmem:[%s558 + $0x38] sm:$0xff] %v556
    $region42: #{tpu_custom_call.1} parent=1 // loop_footer
      %s83 = sadd.s32 1, %s79
    $region43: #{tpu_custom_call.1} parent=1 // loop_footer_branch
      %78 = sbr.rel target = $region39
    $region44: #{tpu_custom_call.1} parent=1 // loop_exit
      _
    // Predicated region
    $region45: #{tpu_custom_call.1} parent=1 // pred_check
      _
    $region46: #{tpu_custom_call.1} parent=1 // pred_check_branch
      %568 = sbr.rel (0) target = $region48
    $region47: #{tpu_custom_call.1} parent=1 // pred_region
      %s570 = ssub.s32 2048, 2048
      %571 = vsyncadd [#allocation3], %s570
      %s572 = sshll.u32 [#allocation2], 4
      %s573 = int_to_ptr.vmem [resolvable:$true] %s572
      %578 = dma.vmem_to_hbm [thread:$0]  %s573, 2048, %s9, [#allocation3], 256, 256, 16
    $region48: #{tpu_custom_call.1} parent=1 // pred_fallthru
      _
    // Predicated region
    $region49: #{tpu_custom_call.1} parent=1 // pred_check
      _
    $region50: #{tpu_custom_call.1} parent=1 // pred_check_branch
      %580 = sbr.rel (0) target = $region52
    $region51: #{tpu_custom_call.1} parent=1 // pred_region
      %581 = dma.done [#allocation3], 2048
    $region52: #{tpu_custom_call.1} parent=1 // pred_fallthru
      _
    %582 = vsyncpa [#allocation3], 1

</llo_original>
